<compile_context>
chip_gen: v7x
topology: tpu7x:2x2x1
jax: 0.10.0
libtpu: 0.0.40
codegen_flags: <defaults>
</compile_context>

<pallas_src>
import math
import functools

import jax
import jax.numpy as jnp
from jax.experimental import pallas as pl
from jax.experimental.pallas import tpu as pltpu


# ---------------------------------------------------------------------------
# helpers
# ---------------------------------------------------------------------------

def _round_up(x, m):
    return ((x + m - 1) // m) * m


def _sublane_align(dtype):
    """dtype-native sublane multiple: 8 for 32-bit, 16 for 16-bit, 32 for 8-bit."""
    bits = jnp.dtype(dtype).itemsize * 8
    return max(8, 256 // bits)


def _choose_tile(dim, align, cap):
    """Pick an `align`-multiple tile <= cap minimizing the padded extent.

    Returns (tile, padded_dim) with padded_dim % tile == 0.
    Among ties, prefers the largest tile (fewer grid steps)."""
    dim_a = _round_up(dim, align)
    cap = max(align, min(cap, dim_a))
    best_t, best_pad = align, None
    for t in range(align, cap + 1, align):
        padded = _round_up(dim_a, t)
        if best_pad is None or padded < best_pad or (padded == best_pad and t > best_t):
            best_t, best_pad = t, padded
    return best_t, best_pad


def _split_tile(total, tile, align):
    """Largest tile' <= tile//2 (multiple of align) dividing `total`, else `tile`."""
    t = (tile // 2) // align * align
    while t >= align:
        if total % t == 0:
            return t
        t -= align
    return tile


# ---------------------------------------------------------------------------
# kernels
# ---------------------------------------------------------------------------

def _epilogue(out_f32, b_f32, activation, negative_slope, act_scale):
    out = out_f32 + b_f32
    if activation:
        out = jnp.where(out >= 0.0, out, out * negative_slope) * act_scale
    return out


def _kernel_kresident(x_ref, w_ref, b_ref, o_ref, *, activation,
                      negative_slope, act_scale):
    # x_ref: (tm, Kp)  w_ref: (Kp, tn)  b_ref: (1, tn)  o_ref: (tm, tn)
    out = jnp.dot(x_ref[...], w_ref[...], preferred_element_type=jnp.float32)
    out = _epilogue(out, b_ref[...].astype(jnp.float32),
                    activation, negative_slope, act_scale)
    o_ref[...] = out.astype(o_ref.dtype)


def _kernel_ktiled_f32out(x_ref, w_ref, b_ref, o_ref, *, activation,
                          negative_slope, act_scale):
    # f32 output: accumulate directly into the resident output block.
    k = pl.program_id(2)

    @pl.when(k == 0)
    def _():
        o_ref[...] = jnp.zeros_like(o_ref)

    o_ref[...] += jnp.dot(x_ref[...], w_ref[...],
                          preferred_element_type=jnp.float32)

    @pl.when(k == pl.num_programs(2) - 1)
    def _():
        o_ref[...] = _epilogue(o_ref[...], b_ref[...].astype(jnp.float32),
                               activation, negative_slope, act_scale)


def _kernel_ktiled_acc(x_ref, w_ref, b_ref, o_ref, acc_ref, *, activation,
                       negative_slope, act_scale):
    # Non-f32 output: f32 scratch accumulator, resident across the K axis.
    k = pl.program_id(2)

    @pl.when(k == 0)
    def _():
        acc_ref[...] = jnp.zeros_like(acc_ref)

    acc_ref[...] += jnp.dot(x_ref[...], w_ref[...],
                            preferred_element_type=jnp.float32)

    @pl.when(k == pl.num_programs(2) - 1)
    def _():
        out = _epilogue(acc_ref[...], b_ref[...].astype(jnp.float32),
                        activation, negative_slope, act_scale)
        o_ref[...] = out.astype(o_ref.dtype)


# ---------------------------------------------------------------------------
# parameter prep (do once, cache, reuse across forwards)
# ---------------------------------------------------------------------------

def prepare_equal_linear(weight, bias, *, lr_mul=1.0, activation=None,
                         param_dtype=None, tn_max=512, tk_max=1024):
    """One-time host prep: fold scale into W, transpose to (K, N), pad, fold
    lr_mul into bias, optionally cast to a low-precision feed dtype (bf16 on
    v6e/v7x).  The returned dict should be cached and reused across calls."""
    N, K = weight.shape
    scale = (1.0 / math.sqrt(K)) * lr_mul

    tn, Np = _choose_tile(N, 128, tn_max)
    tk, Kp = _choose_tile(K, 128, tk_max)

    # Fold scale into the weight (matches the reference W*scale formulation) and
    # pre-transpose to (K, N) so the MXU contracts natively, N lane-dense.
    w_t = jnp.pad((weight.astype(jnp.float32) * scale).T,
                  ((0, Kp - K), (0, Np - N)))

    if bias is None:
        # TODO(synk): the PyTorch forward raises when bias=None (it always does
        # self.bias * self.lr_mul); a zero bias is substituted here instead.
        b = jnp.zeros((N,), jnp.float32)
    else:
        b = bias.astype(jnp.float32) * lr_mul
    b_p = jnp.pad(b, ((0, Np - N),)).reshape(1, Np)

    if param_dtype is not None:
        w_t = w_t.astype(param_dtype)
        b_p = b_p.astype(param_dtype)

    return dict(w_t=w_t, b=b_p, N=N, K=K, tn=tn, tk=tk,
                activation=bool(activation))


# ---------------------------------------------------------------------------
# forward
# ---------------------------------------------------------------------------

def equal_linear_apply(x, params, *, tm_max=512, force_k_tiled=False,
                       resident_vmem_budget=28 << 20):
    """Pallas-backed EqualLinear forward using pre-prepared parameters."""
    N, K = params["N"], params["K"]
    w_t, b_p = params["w_t"], params["b"]
    tn, tk = params["tn"], params["tk"]
    activation = params["activation"]
    Kp, Np = w_t.shape

    orig_shape = x.shape
    x2 = x.reshape(-1, orig_shape[-1])
    assert x2.shape[-1] == K
    M = x2.shape[0]
    out_dtype = x2.dtype

    # Feed the MXU in the cached parameter dtype (e.g. bf16 on v6e/v7x).
    if x2.dtype != w_t.dtype:
        x2 = x2.astype(w_t.dtype)

    sub = _sublane_align(x2.dtype)
    tm, Mp = _choose_tile(M, sub, tm_max)
    x_p = jnp.pad(x2, ((0, Mp - M), (0, Kp - K)))

    gm, gn = Mp // tm, Np // tn
    # v7x megacore: make sure at least one parallel axis has >= 2 programs.
    if gm == 1 and gn == 1:
        t = _split_tile(Mp, tm, sub)
        if t < tm:
            tm, gm = t, Mp // t
        else:
            t = _split_tile(Np, tn, 128)
            if t < tn:
                tn, gn = t, Np // t

    in_bytes = jnp.dtype(x2.dtype).itemsize
    w_bytes = jnp.dtype(w_t.dtype).itemsize
    out_bytes = jnp.dtype(out_dtype).itemsize

    kern_kwargs = dict(activation=activation, negative_slope=0.2,
                       act_scale=math.sqrt(2.0))

    # --- choose path: K-resident (weight read once from HBM per call) vs K-tiled
    resident_est = (2 * (tm * Kp * in_bytes + Kp * tn * w_bytes + tn * w_bytes)
                    + 2 * tm * tn * out_bytes)
    use_resident = (not force_k_tiled) and resident_est <= resident_vmem_budget

    if use_resident:
        grid = (gm, gn)
        kernel = functools.partial(_kernel_kresident, **kern_kwargs)
        in_specs = [
            pl.BlockSpec((tm, Kp), lambda i, j: (i, 0)),
            pl.BlockSpec((Kp, tn), lambda i, j: (0, j)),
            pl.BlockSpec((1, tn), lambda i, j: (0, j)),
        ]
        out_specs = pl.BlockSpec((tm, tn), lambda i, j: (i, j))
        scratch = []
        dims = ("parallel", "parallel")
        vmem_est = resident_est
    else:
        gk = Kp // tk
        grid = (gm, gn, gk)
        if jnp.dtype(out_dtype) == jnp.dtype(jnp.float32):
            kernel = functools.partial(_kernel_ktiled_f32out, **kern_kwargs)
            scratch = []
        else:
            kernel = functools.partial(_kernel_ktiled_acc, **kern_kwargs)
            scratch = [pltpu.VMEM((tm, tn), jnp.float32)]
        in_specs = [
            pl.BlockSpec((tm, tk), lambda i, j, k: (i, k)),
            pl.BlockSpec((tk, tn), lambda i, j, k: (k, j)),
            pl.BlockSpec((1, tn), lambda i, j, k: (0, j)),
        ]
        out_specs = pl.BlockSpec((tm, tn), lambda i, j, k: (i, j))
        dims = ("parallel", "parallel", "arbitrary")
        vmem_est = (2 * (tm * tk * in_bytes + tk * tn * w_bytes + tn * w_bytes)
                    + 2 * tm * tn * out_bytes + tm * tn * 4)

    vmem_limit = int(min(max(int(vmem_est * 1.5) + (4 << 20), 24 << 20), 64 << 20))

    cost = pl.CostEstimate(
        flops=2 * M * N * K,
        transcendentals=0,
        bytes_accessed=(M * K * in_bytes + K * N * w_bytes + N * w_bytes
                        + M * N * out_bytes),
    )

    out_p = pl.pallas_call(
        kernel,
        out_shape=jax.ShapeDtypeStruct((Mp, Np), out_dtype),
        grid_spec=pltpu.PrefetchScalarGridSpec(
            num_scalar_prefetch=0,
            grid=grid,
            in_specs=in_specs,
            out_specs=out_specs,
            scratch_shapes=scratch,
        ),
        compiler_params=pltpu.CompilerParams(
            dimension_semantics=dims,
            vmem_limit_bytes=vmem_limit,
        ),
        cost_estimate=cost,
    )(x_p, w_t, b_p)

    out = out_p[:M, :N]
    return out.reshape(orig_shape[:-1] + (N,))


def equal_linear(x, weight, bias, *, lr_mul=1.0, activation=None,
                 param_dtype=None, **apply_kwargs):
    """Convenience one-shot wrapper.  For repeated calls, build params once with
    prepare_equal_linear() and reuse them (that is where the host-side
    transpose/pad/scale-fold cost lives)."""
    params = prepare_equal_linear(weight, bias, lr_mul=lr_mul,
                                  activation=activation, param_dtype=param_dtype)
    return equal_linear_apply(x, params, **apply_kwargs)


# ---------------------------------------------------------------------------
# pure-JAX reference (mirrors the PyTorch module forward)
# ---------------------------------------------------------------------------

def equal_linear_ref(x, weight, bias, *, lr_mul=1.0, activation=None):
    scale = (1.0 / math.sqrt(weight.shape[1])) * lr_mul
    out = x.astype(jnp.float32) @ (weight.astype(jnp.float32) * scale).T
    b = (bias.astype(jnp.float32) * lr_mul) if bias is not None else 0.0
    out = out + b
    if activation:
        out = jnp.where(out >= 0.0, out, out * 0.2) * math.sqrt(2.0)
    return out


# ---------------------------------------------------------------------------
# self-test
# ---------------------------------------------------------------------------

if __name__ == "__main__":
    key = jax.random.PRNGKey(0)
    k1, k2, k3, k4 = jax.random.split(key, 4)

    # -- Test 1: small f32 mapping-network shape, both activation modes,
    #    K-resident path (weight held in VMEM, no K grid axis), cached params.
    batch, in_dim, out_dim = 8, 32, 16
    lr_mul = 0.5
    weight = jax.random.normal(k1, (out_dim, in_dim), jnp.float32) / lr_mul
    bias = jnp.full((out_dim,), 0.1, jnp.float32)
    x = jax.random.normal(k2, (batch, in_dim), jnp.float32)

    params_lin = prepare_equal_linear(weight, bias, lr_mul=lr_mul, activation=None)
    params_act = prepare_equal_linear(weight, bias, lr_mul=lr_mul,
                                      activation="fused_lrelu")

    out_lin = jax.block_until_ready(equal_linear_apply(x, params_lin))
    out_act = jax.block_until_ready(equal_linear_apply(x, params_act))
    ref_lin = equal_linear_ref(x, weight, bias, lr_mul=lr_mul, activation=None)
    ref_act = equal_linear_ref(x, weight, bias, lr_mul=lr_mul,
                               activation="fused_lrelu")
    assert out_lin.shape == (batch, out_dim)
    assert out_act.shape == (batch, out_dim)
    assert jnp.allclose(out_lin, ref_lin.astype(out_lin.dtype), atol=1e-4, rtol=1e-4)
    assert jnp.allclose(out_act, ref_act.astype(out_act.dtype), atol=1e-4, rtol=1e-4)

    # -- Test 2: f32, awkward (non-aligned) shapes, forced K-tiled path
    #    (exercises the accumulate-into-f32-output kernel, gk > 1).
    b2, k_dim2, n_dim2 = 20, 300, 257
    w2 = jax.random.normal(k3, (n_dim2, k_dim2), jnp.float32)
    bi2 = jax.random.normal(k4, (n_dim2,), jnp.float32) * 0.1
    x2 = jax.random.normal(k2, (b2, k_dim2), jnp.float32)
    params2 = prepare_equal_linear(w2, bi2, lr_mul=1.0,
                                   activation="fused_lrelu", tk_max=128)
    out2 = jax.block_until_ready(
        equal_linear_apply(x2, params2, force_k_tiled=True))
    ref2 = equal_linear_ref(x2, w2, bi2, lr_mul=1.0, activation="fused_lrelu")
    assert out2.shape == (b2, n_dim2)
    assert jnp.allclose(out2, ref2.astype(out2.dtype), atol=1e-3, rtol=1e-3)

    # -- Test 3: bf16 cached params + bf16 activations (v6e/v7x low-precision
    #    feed), K-resident path; reference built from the same bf16 params.
    params3 = prepare_equal_linear(w2, bi2, lr_mul=1.0,
                                   activation="fused_lrelu",
                                   param_dtype=jnp.bfloat16)
    x3 = x2.astype(jnp.bfloat16)
    out3 = jax.block_until_ready(equal_linear_apply(x3, params3))
    w3f = params3["w_t"][:k_dim2, :n_dim2].astype(jnp.float32)
    b3f = params3["b"][0, :n_dim2].astype(jnp.float32)
    ref3 = x3.astype(jnp.float32) @ w3f + b3f
    ref3 = jnp.where(ref3 >= 0.0, ref3, ref3 * 0.2) * math.sqrt(2.0)
    assert out3.shape == (b2, n_dim2)
    assert jnp.allclose(out3.astype(jnp.float32), ref3, atol=5e-2, rtol=5e-2)

    # -- Test 4: bf16 output + forced K-tiled path (exercises the scratch
    #    accumulator kernel variant).
    params4 = prepare_equal_linear(w2, bi2, lr_mul=1.0,
                                   activation="fused_lrelu",
                                   param_dtype=jnp.bfloat16, tk_max=128)
    out4 = jax.block_until_ready(
        equal_linear_apply(x3, params4, force_k_tiled=True))
    assert out4.shape == (b2, n_dim2)
    assert jnp.allclose(out4.astype(jnp.float32), ref3, atol=5e-2, rtol=5e-2)

    print("KERNEL_OK")
</pallas_src>

<mosaic_0001>
module attributes {stable_mosaic.version = 11 : i64} {
  func.func @_kernel_kresident(%arg0: i32, %arg1: i32, %arg2: memref<8x128xf32, #tpu.memory_space<vmem>>, %arg3: memref<128x128xf32, #tpu.memory_space<vmem>>, %arg4: memref<1x128xf32, #tpu.memory_space<vmem>>, %arg5: memref<8x128xf32, #tpu.memory_space<vmem>>) attributes {dimension_semantics = [#tpu.dimension_semantics<parallel>, #tpu.dimension_semantics<parallel>], iteration_bounds = array<i64: 1, 1>, scalar_prefetch = 0 : i64, scratch_operands = 0 : i64, tpu.core_type = #tpu.core_type<tc>, window_params = [{transform_indices = @transform_0, window_bounds = array<i64: 8, 128>}, {transform_indices = @transform_1, window_bounds = array<i64: 128, 128>}, {transform_indices = @transform_2, window_bounds = array<i64: 1, 128>}, {transform_indices = @transform_3, window_bounds = array<i64: 8, 128>}]} {
    %c0 = arith.constant 0 : index
    %c0_0 = arith.constant 0 : index
    %0 = vector.load %arg2[%c0, %c0_0] : memref<8x128xf32, #tpu.memory_space<vmem>>, vector<8x128xf32>
    %c0_1 = arith.constant 0 : index
    %c0_2 = arith.constant 0 : index
    %1 = vector.load %arg3[%c0_1, %c0_2] : memref<128x128xf32, #tpu.memory_space<vmem>>, vector<128x128xf32>
    %cst = arith.constant dense<0.000000e+00> : vector<8x128xf32>
    %2 = tpu.matmul %0, %1, %cst {dimension_numbers = #tpu.dot_dimension_numbers<[1], [0], [0], [1], [0, 0, 1, 1], [], []>} : vector<8x128xf32>, vector<128x128xf32>, vector<8x128xf32> -> vector<8x128xf32>
    %c0_3 = arith.constant 0 : index
    %c0_4 = arith.constant 0 : index
    %3 = vector.load %arg4[%c0_3, %c0_4] : memref<1x128xf32, #tpu.memory_space<vmem>>, vector<1x128xf32>
    %4 = vector.broadcast %3 : vector<1x128xf32> to vector<8x128xf32>
    %5 = arith.addf %2, %4 : vector<8x128xf32>
    %c0_5 = arith.constant 0 : index
    %c0_6 = arith.constant 0 : index
    %6 = vector.load %arg5[%c0_5, %c0_6] : memref<8x128xf32, #tpu.memory_space<vmem>>, vector<8x128xf32>
    tpu.vector_store %arg5[%c0_5, %c0_6], %5 {strides = array<i32>} : memref<8x128xf32, #tpu.memory_space<vmem>>, vector<8x128xf32>,
    return
  }
  func.func @transform_0(%arg0: i32, %arg1: i32) -> (i32, i32) {
    %c0_i32 = arith.constant 0 : i32
    %c0_i32_0 = arith.constant 0 : i32
    return %arg0, %c0_i32 : i32, i32
  }
  func.func @transform_1(%arg0: i32, %arg1: i32) -> (i32, i32) {
    %c0_i32 = arith.constant 0 : i32
    %c0_i32_0 = arith.constant 0 : i32
    return %c0_i32, %arg1 : i32, i32
  }
  func.func @transform_2(%arg0: i32, %arg1: i32) -> (i32, i32) {
    %c0_i32 = arith.constant 0 : i32
    %c0_i32_0 = arith.constant 0 : i32
    return %c0_i32, %arg1 : i32, i32
  }
  func.func @transform_3(%arg0: i32, %arg1: i32) -> (i32, i32) {
    %c0_i32 = arith.constant 0 : i32
    return %arg0, %arg1 : i32, i32
  }
}

</mosaic_0001>

<llo_original>
// kernel: tpu_custom_call.1
$region0: #{tpu_custom_call.1}
  #allocation0 [shape = 'u32[]', space=smem, size = 0x4, offset = 0x4, fixed_abs, tag = 'smem constant byte address 0x4 - core index']
  #allocation1 [shape = 'u32[144,128]{1,0:T(1,128)}', space=vmem, size = 0x12000, scoped, tag = 'internal scratch']
  %s0 = inlined_call_operand.hbm [shape: f32[8,128], index: 0, kind: input, shape index: {}]
  %s1 = inlined_call_operand.hbm [shape: f32[128,128], index: 1, kind: input, shape index: {}]
  %s2 = inlined_call_operand.vmem [shape: f32[1,128], index: 2, kind: input, shape index: {}]
  %s3 = inlined_call_operand.hbm [shape: f32[8,128], index: 3, kind: output, shape index: {}]
  %s4 = sld [smem:[#allocation0]]
  $region30: #{tpu_custom_call.1} parent=0
    _
  %s6 = ssub.s32 1, %s4
  %s7 = scalar_select 0, %s6, %s4
  $region1: #{tpu_custom_call.1} parent=0
    #allocation2 [shape = 'u8[4096]{0}', space=vmem, size = 0x1000, scoped, tag = 'input window, operand 0, single buffered']
    #allocation3 [shape = 's32[1]{0}', space=sflag, size = 0x4, scoped, tag = 'scoped memory for tpu_custom_call.1']
    #allocation4 [shape = 's32[1]{0}', space=sflag, size = 0x4, scoped, tag = 'scoped memory for tpu_custom_call.1']
    #allocation5 [shape = 'u8[65536]{0}', space=vmem, size = 0x10000, scoped, tag = 'input window, operand 1, single buffered']
    #allocation6 [shape = 's32[1]{0}', space=sflag, size = 0x4, scoped, tag = 'scoped memory for tpu_custom_call.1']
    #allocation7 [shape = 'u8[4096]{0}', space=vmem, size = 0x1000, scoped, tag = 'output window, operand 0, single buffered']
    %8 = vsyncpa [#allocation3], 0
    %9 = vsyncpa [#allocation6], 0
    %10 = vsyncpa [#allocation4], 0
    // Predicated region
    $region2: #{tpu_custom_call.1} parent=1 // pred_check
      _
    $region3: #{tpu_custom_call.1} parent=1 // pred_check_branch
      %12 = sbr.rel (0) target = $region5
    $region4: #{tpu_custom_call.1} parent=1 // pred_region
      %s14 = ssub.s32 128, 128
      %15 = vsyncadd [#allocation3], %s14
      %s17 = sshll.u32 [#allocation2], 4
      %s18 = int_to_ptr.vmem [resolvable:$true] %s17
      %20 = dma.hbm_to_vmem [thread:$0]  %s0, 128, %s18, [#allocation3]
    $region5: #{tpu_custom_call.1} parent=1 // pred_fallthru
      _
    // Predicated region
    $region6: #{tpu_custom_call.1} parent=1 // pred_check
      _
    $region7: #{tpu_custom_call.1} parent=1 // pred_check_branch
      %22 = sbr.rel (0) target = $region9
    $region8: #{tpu_custom_call.1} parent=1 // pred_region
      %s24 = ssub.s32 2048, 2048
      %25 = vsyncadd [#allocation6], %s24
      %s26 = sshll.u32 [#allocation5], 4
      %s27 = int_to_ptr.vmem [resolvable:$true] %s26
      %32 = dma.hbm_to_vmem [thread:$0]  %s1, 2048, %s27, [#allocation6], 128, 128, 8
    $region9: #{tpu_custom_call.1} parent=1 // pred_fallthru
      _
    // Predicated region
    $region10: #{tpu_custom_call.1} parent=1 // pred_check
      _
    $region11: #{tpu_custom_call.1} parent=1 // pred_check_branch
      %34 = sbr.rel (0) target = $region13
    $region12: #{tpu_custom_call.1} parent=1 // pred_region
      _
    $region13: #{tpu_custom_call.1} parent=1 // pred_fallthru
      _
    // Predicated region
    $region14: #{tpu_custom_call.1} parent=1 // pred_check
      _
    $region15: #{tpu_custom_call.1} parent=1 // pred_check_branch
      %36 = sbr.rel (0) target = $region17
    $region16: #{tpu_custom_call.1} parent=1 // pred_region
      %37 = dma.done [#allocation3], 128
    $region17: #{tpu_custom_call.1} parent=1 // pred_fallthru
      _
    // Predicated region
    $region18: #{tpu_custom_call.1} parent=1 // pred_check
      _
    $region19: #{tpu_custom_call.1} parent=1 // pred_check_branch
      %39 = sbr.rel (0) target = $region21
    $region20: #{tpu_custom_call.1} parent=1 // pred_region
      %40 = dma.done [#allocation6], 2048
    $region21: #{tpu_custom_call.1} parent=1 // pred_fallthru
      _
    %v41 = vld [vmem:[#allocation2] sm:$0xff]
    %v42 = vld [vmem:[#allocation5] sm:$0xff]
    %v43 = vld [vmem:[#allocation5 + $0x8] sm:$0xff]
    %v44 = vld [vmem:[#allocation5 + $0x10] sm:$0xff]
    %v45 = vld [vmem:[#allocation5 + $0x18] sm:$0xff]
    %v46 = vld [vmem:[#allocation5 + $0x20] sm:$0xff]
    %v47 = vld [vmem:[#allocation5 + $0x28] sm:$0xff]
    %v48 = vld [vmem:[#allocation5 + $0x30] sm:$0xff]
    %v49 = vld [vmem:[#allocation5 + $0x38] sm:$0xff]
    %v50 = vld [vmem:[#allocation5 + $0x40] sm:$0xff]
    %v51 = vld [vmem:[#allocation5 + $0x48] sm:$0xff]
    %v52 = vld [vmem:[#allocation5 + $0x50] sm:$0xff]
    %v53 = vld [vmem:[#allocation5 + $0x58] sm:$0xff]
    %v54 = vld [vmem:[#allocation5 + $0x60] sm:$0xff]
    %v55 = vld [vmem:[#allocation5 + $0x68] sm:$0xff]
    %v56 = vld [vmem:[#allocation5 + $0x70] sm:$0xff]
    %v57 = vld [vmem:[#allocation5 + $0x78] sm:$0xff]
    %v58 = vld [vmem:[%s2] sm:$0x1]
    %v60 = vlaneseq
    %v61 = vshrl.u32 %v60, 7
    %v62 = vsub.s32 0, %v61
    %v63 = vrot.slane %v58, %v62
    %65 = vmatprep.subr.mxu0 0.0
    %66 = vmatpush1.msra.mxu0 %v42
    %67 = vmatprep.subr.mxu0 0.0
    %68 = vmatpush1.msra.mxu0 %v43
    %69 = vmatprep.subr.mxu0 0.0
    %70 = vmatpush1.msra.mxu0 %v44
    %71 = vmatprep.subr.mxu0 0.0
    %72 = vmatpush1.msra.mxu0 %v45
    %73 = vmatprep.subr.mxu0 0.0
    %74 = vmatpush1.msra.mxu0 %v46
    %75 = vmatprep.subr.mxu0 0.0
    %76 = vmatpush1.msra.mxu0 %v47
    %77 = vmatprep.subr.mxu0 0.0
    %78 = vmatpush1.msra.mxu0 %v48
    %79 = vmatprep.subr.mxu0 0.0
    %80 = vmatpush1.msra.mxu0 %v49
    %81 = vmatprep.subr.mxu0 0.0
    %82 = vmatpush1.msra.mxu0 %v50
    %83 = vmatprep.subr.mxu0 0.0
    %84 = vmatpush1.msra.mxu0 %v51
    %85 = vmatprep.subr.mxu0 0.0
    %86 = vmatpush1.msra.mxu0 %v52
    %87 = vmatprep.subr.mxu0 0.0
    %88 = vmatpush1.msra.mxu0 %v53
    %89 = vmatprep.subr.mxu0 0.0
    %90 = vmatpush1.msra.mxu0 %v54
    %91 = vmatprep.subr.mxu0 0.0
    %92 = vmatpush1.msra.mxu0 %v55
    %93 = vmatprep.subr.mxu0 0.0
    %94 = vmatpush1.msra.mxu0 %v56
    %95 = vmatprep.subr.mxu0 0.0
    %96 = vmatpush1.msra.mxu0 %v57
    %97 = vmatprep.subr.mxu0 0.0
    %98 = vmatpush1.msra.mxu0 0.0
    %99 = vmatprep.subr.mxu0 0.0
    %100 = vmatpush1.msra.mxu0 0.0
    %101 = vmatprep.subr.mxu0 0.0
    %102 = vmatpush1.msra.mxu0 0.0
    %103 = vmatprep.subr.mxu0 0.0
    %104 = vmatpush1.msra.mxu0 0.0
    %105 = vmatprep.subr.mxu0 0.0
    %106 = vmatpush1.msra.mxu0 0.0
    %107 = vmatprep.subr.mxu0 0.0
    %108 = vmatpush1.msra.mxu0 0.0
    %109 = vmatprep.subr.mxu0 0.0
    %110 = vmatpush1.msra.mxu0 0.0
    %111 = vmatprep.subr.mxu0 0.0
    %112 = vmatpush1.msra.mxu0 0.0
    %113 = vmatprep.subr.mxu0 0.0
    %114 = vmatpush1.msra.mxu0 0.0
    %115 = vmatprep.subr.mxu0 0.0
    %116 = vmatpush1.msra.mxu0 0.0
    %117 = vmatprep.subr.mxu0 0.0
    %118 = vmatpush1.msra.mxu0 0.0
    %119 = vmatprep.subr.mxu0 0.0
    %120 = vmatpush1.msra.mxu0 0.0
    %121 = vmatprep.subr.mxu0 0.0
    %122 = vmatpush1.msra.mxu0 0.0
    %123 = vmatprep.subr.mxu0 0.0
    %124 = vmatpush1.msra.mxu0 0.0
    %125 = vmatprep.subr.mxu0 0.0
    %126 = vmatpush1.msra.mxu0 0.0
    %127 = vmatprep.subr.mxu0 0.0
    %128 = vmatpush1.msra.mxu0 0.0
    %129 = vmatprep.mubr.f32.mxu0 0.0
    %130 = vmatmul.mubr.f32.gmra.mrb[0].mxu0 %v41
    %v131 = vpop.f32.mrb[0].mxu0
    %v132 = vadd.f32 %v63, %v131
    %v133 = vpop.f32.mrb[0].mxu0
    %134 = vdwg.mxu0
    %135 = vst [vmem:[#allocation7] sm:$0xff] %v132
    // Predicated region
    $region22: #{tpu_custom_call.1} parent=1 // pred_check
      _
    $region23: #{tpu_custom_call.1} parent=1 // pred_check_branch
      %137 = sbr.rel (0) target = $region25
    $region24: #{tpu_custom_call.1} parent=1 // pred_region
      %s139 = ssub.s32 128, 128
      %140 = vsyncadd [#allocation4], %s139
      %s142 = sshll.u32 [#allocation7], 4
      %s143 = int_to_ptr.vmem [resolvable:$true] %s142
      %145 = dma.vmem_to_hbm [thread:$0]  %s143, 128, %s3, [#allocation4]
    $region25: #{tpu_custom_call.1} parent=1 // pred_fallthru
      _
    // Predicated region
    $region26: #{tpu_custom_call.1} parent=1 // pred_check
      _
    $region27: #{tpu_custom_call.1} parent=1 // pred_check_branch
      %147 = sbr.rel (0) target = $region29
    $region28: #{tpu_custom_call.1} parent=1 // pred_region
      %148 = dma.done [#allocation4], 128
    $region29: #{tpu_custom_call.1} parent=1 // pred_fallthru
      _
    %149 = vsyncpa [#allocation3], 1
    %150 = vsyncpa [#allocation6], 1
    %151 = vsyncpa [#allocation4], 1

</llo_original>
